<compile_context>
chip_gen: v7x
topology: tpu7x:2x2x1
jax: 0.10.0
libtpu: 0.0.40
codegen_flags: <defaults>
</compile_context>

<pallas_src>
import math

import jax
import jax.numpy as jnp
from jax.experimental import pallas as pl
from jax.experimental.pallas import tpu as pltpu


def mlp_kernel(x_ref, w1_ref, w2_ref, w3_ref, b_ref, o_ref):
    b = b_ref[...]  # (1, 512) f32, static lane-aligned slices below

    # fc1 + relu  (bf16 x bf16 -> f32 accumulate on MXU)
    h1 = jnp.dot(x_ref[...], w1_ref[...], preferred_element_type=jnp.float32)
    h1 = jnp.maximum(h1 + b[:, 0:256], 0.0)

    # fc2 + relu
    h2 = jnp.dot(h1.astype(jnp.bfloat16), w2_ref[...],
                 preferred_element_type=jnp.float32)
    h2 = jnp.maximum(h2 + b[:, 256:384], 0.0)

    # fc3 (no activation); output padded to 128 lanes
    h3 = jnp.dot(h2.astype(jnp.bfloat16), w3_ref[...],
                 preferred_element_type=jnp.float32)
    o_ref[...] = (h3 + b[:, 384:512]).astype(o_ref.dtype)


def network_forward(x, prepared_params):
    """x: any array with 784 elements (e.g. (1, 28, 28)). Returns (1, 10) f32."""
    w1, w2, w3, b = prepared_params
    x2d = x.reshape(1, -1).astype(jnp.bfloat16)  # same as torch's x.view(1, -1)

    vmem_spec = pl.BlockSpec(memory_space=pltpu.MemorySpace.VMEM)
    out_padded = pl.pallas_call(
        mlp_kernel,
        out_shape=jax.ShapeDtypeStruct((1, 128), jnp.float32),
        in_specs=[vmem_spec] * 5,
        out_specs=vmem_spec,
    )(x2d, w1, w2, w3, b)
    return out_padded[:, :10]


def init_params(key):
    """f32 params mimicking torch.nn.Linear default init (+-1/sqrt(fan_in)).

    Weights are stored transposed: (in_features, out_features).
    """
    dims = [(28 * 28, 256), (256, 128), (128, 10)]
    params = []
    for fan_in, fan_out in dims:
        key, kw, kb = jax.random.split(key, 3)
        bound = 1.0 / math.sqrt(fan_in)
        w = jax.random.uniform(kw, (fan_in, fan_out), jnp.float32, -bound, bound)
        b = jax.random.uniform(kb, (1, fan_out), jnp.float32, -bound, bound)
        params += [w, b]
    return tuple(params)


def prepare_params(params):
    """Cast weights to bf16, pad layer-3 to 128 output lanes, pack biases."""
    w1, b1, w2, b2, w3, b3 = params
    w3p = jnp.zeros((128, 128), jnp.float32).at[:, :10].set(w3)
    b3p = jnp.zeros((1, 128), jnp.float32).at[:, :10].set(b3)
    b_packed = jnp.concatenate([b1, b2, b3p], axis=1)  # (1, 512) f32
    return (w1.astype(jnp.bfloat16),
            w2.astype(jnp.bfloat16),
            w3p.astype(jnp.bfloat16),
            b_packed)


def reference_forward(x, prepared_params):
    """Pure-JAX reference mirroring the kernel's bf16 casts (f32 math)."""
    w1, w2, w3, b = prepared_params
    f32 = jnp.float32
    h = x.reshape(1, -1).astype(jnp.bfloat16).astype(f32)
    h = jnp.maximum(h @ w1.astype(f32) + b[:, 0:256], 0.0)
    h = h.astype(jnp.bfloat16).astype(f32)
    h = jnp.maximum(h @ w2.astype(f32) + b[:, 256:384], 0.0)
    h = h.astype(jnp.bfloat16).astype(f32)
    h = h @ w3.astype(f32) + b[:, 384:512]
    return h[:, :10]


if __name__ == "__main__":
    key = jax.random.PRNGKey(0)
    key, kx = jax.random.split(key)
    x = jax.random.normal(kx, (1, 28, 28), jnp.float32)

    params = init_params(key)
    prepared = prepare_params(params)

    out = network_forward(x, prepared)
    out = jax.block_until_ready(out)

    ref = reference_forward(x, prepared)
    assert out.shape == (1, 10), out.shape
    assert jnp.allclose(out, ref, atol=1e-2, rtol=1e-2), (out, ref)

    print("KERNEL_OK")
</pallas_src>

<mosaic_0001>
module attributes {stable_mosaic.version = 11 : i64} {
  func.func @mlp_kernel(%arg0: memref<1x784xbf16, #tpu.memory_space<vmem>>, %arg1: memref<784x256xbf16, #tpu.memory_space<vmem>>, %arg2: memref<256x128xbf16, #tpu.memory_space<vmem>>, %arg3: memref<128x128xbf16, #tpu.memory_space<vmem>>, %arg4: memref<1x512xf32, #tpu.memory_space<vmem>>, %arg5: memref<1x128xf32, #tpu.memory_space<vmem>>) attributes {dimension_semantics = [], scalar_prefetch = 0 : i64, scratch_operands = 0 : i64, tpu.core_type = #tpu.core_type<tc>} {
    %c0 = arith.constant 0 : index
    %c0_0 = arith.constant 0 : index
    %0 = vector.load %arg4[%c0, %c0_0] : memref<1x512xf32, #tpu.memory_space<vmem>>, vector<1x512xf32>
    %c0_1 = arith.constant 0 : index
    %c0_2 = arith.constant 0 : index
    %1 = vector.load %arg0[%c0_1, %c0_2] : memref<1x784xbf16, #tpu.memory_space<vmem>>, vector<1x784xbf16>
    %c0_3 = arith.constant 0 : index
    %c0_4 = arith.constant 0 : index
    %2 = vector.load %arg1[%c0_3, %c0_4] : memref<784x256xbf16, #tpu.memory_space<vmem>>, vector<784x256xbf16>
    %cst = arith.constant dense<0.000000e+00> : vector<1x256xf32>
    %3 = tpu.matmul %1, %2, %cst {dimension_numbers = #tpu.dot_dimension_numbers<[1], [0], [0], [1], [0, 0, 1, 1], [], []>} : vector<1x784xbf16>, vector<784x256xbf16>, vector<1x256xf32> -> vector<1x256xf32>
    %4 = vector.extract_strided_slice %0 {offsets = [0, 0], sizes = [1, 256], strides = [1, 1]} : vector<1x512xf32> to vector<1x256xf32>
    %5 = arith.addf %3, %4 : vector<1x256xf32>
    %cst_5 = arith.constant 0.000000e+00 : f32
    %6 = vector.broadcast %cst_5 : f32 to vector<1x256xf32>
    %7 = arith.maximumf %5, %6 : vector<1x256xf32>
    %8 = arith.truncf %7 : vector<1x256xf32> to vector<1x256xbf16>
    %c0_6 = arith.constant 0 : index
    %c0_7 = arith.constant 0 : index
    %9 = vector.load %arg2[%c0_6, %c0_7] : memref<256x128xbf16, #tpu.memory_space<vmem>>, vector<256x128xbf16>
    %cst_8 = arith.constant dense<0.000000e+00> : vector<1x128xf32>
    %10 = tpu.matmul %8, %9, %cst_8 {dimension_numbers = #tpu.dot_dimension_numbers<[1], [0], [0], [1], [0, 0, 1, 1], [], []>} : vector<1x256xbf16>, vector<256x128xbf16>, vector<1x128xf32> -> vector<1x128xf32>
    %11 = vector.extract_strided_slice %0 {offsets = [0, 256], sizes = [1, 128], strides = [1, 1]} : vector<1x512xf32> to vector<1x128xf32>
    %12 = arith.addf %10, %11 : vector<1x128xf32>
    %cst_9 = arith.constant 0.000000e+00 : f32
    %13 = vector.broadcast %cst_9 : f32 to vector<1x128xf32>
    %14 = arith.maximumf %12, %13 : vector<1x128xf32>
    %15 = arith.truncf %14 : vector<1x128xf32> to vector<1x128xbf16>
    %c0_10 = arith.constant 0 : index
    %c0_11 = arith.constant 0 : index
    %16 = vector.load %arg3[%c0_10, %c0_11] : memref<128x128xbf16, #tpu.memory_space<vmem>>, vector<128x128xbf16>
    %cst_12 = arith.constant dense<0.000000e+00> : vector<1x128xf32>
    %17 = tpu.matmul %15, %16, %cst_12 {dimension_numbers = #tpu.dot_dimension_numbers<[1], [0], [0], [1], [0, 0, 1, 1], [], []>} : vector<1x128xbf16>, vector<128x128xbf16>, vector<1x128xf32> -> vector<1x128xf32>
    %18 = vector.extract_strided_slice %0 {offsets = [0, 384], sizes = [1, 128], strides = [1, 1]} : vector<1x512xf32> to vector<1x128xf32>
    %19 = arith.addf %17, %18 : vector<1x128xf32>
    %c0_13 = arith.constant 0 : index
    %c0_14 = arith.constant 0 : index
    %20 = vector.load %arg5[%c0_13, %c0_14] : memref<1x128xf32, #tpu.memory_space<vmem>>, vector<1x128xf32>
    tpu.vector_store %arg5[%c0_13, %c0_14], %19 {strides = array<i32>} : memref<1x128xf32, #tpu.memory_space<vmem>>, vector<1x128xf32>,
    return
  }
}

</mosaic_0001>

<llo_original>
// kernel: tpu_custom_call.1
$region0: #{tpu_custom_call.1}
  #allocation0 [shape = 'u32[]', space=smem, size = 0x4, offset = 0x4, fixed_abs, tag = 'smem constant byte address 0x4 - core index']
  #allocation1 [shape = 'u32[144,128]{1,0:T(1,128)}', space=vmem, size = 0x12000, scoped, tag = 'internal scratch']
  %s0 = inlined_call_operand.hbm [shape: bf16[1,784], index: 0, kind: input, shape index: {}]
  %s1 = inlined_call_operand.hbm [shape: bf16[784,256], index: 1, kind: input, shape index: {}]
  %s2 = inlined_call_operand.hbm [shape: bf16[256,128], index: 2, kind: input, shape index: {}]
  %s3 = inlined_call_operand.hbm [shape: bf16[128,128], index: 3, kind: input, shape index: {}]
  %s4 = inlined_call_operand.vmem [shape: f32[1,512], index: 4, kind: input, shape index: {}]
  %s5 = inlined_call_operand.hbm [shape: f32[1,128], index: 5, kind: output, shape index: {}]
  %s6 = sld [smem:[#allocation0]]
  $region46: #{tpu_custom_call.1} parent=0
    _
  %s8 = ssub.s32 1, %s6
  %s9 = scalar_select 0, %s8, %s6
  $region1: #{tpu_custom_call.1} parent=0
    #allocation2 [shape = 'u8[3584]{0}', space=vmem, size = 0x1000, scoped, tag = 'input window, operand 0, single buffered']
    #allocation3 [shape = 's32[1]{0}', space=sflag, size = 0x4, scoped, tag = 'scoped memory for tpu_custom_call.1']
    #allocation4 [shape = 's32[1]{0}', space=sflag, size = 0x4, scoped, tag = 'scoped memory for tpu_custom_call.1']
    #allocation5 [shape = 'u8[401408]{0}', space=vmem, size = 0x62000, scoped, tag = 'input window, operand 1, single buffered']
    #allocation6 [shape = 's32[1]{0}', space=sflag, size = 0x4, scoped, tag = 'scoped memory for tpu_custom_call.1']
    #allocation7 [shape = 'u8[65536]{0}', space=vmem, size = 0x10000, scoped, tag = 'input window, operand 2, single buffered']
    #allocation8 [shape = 'u8[32768]{0}', space=vmem, size = 0x8000, scoped, tag = 'input window, operand 3, single buffered']
    #allocation9 [shape = 's32[1]{0}', space=sflag, size = 0x4, scoped, tag = 'scoped memory for tpu_custom_call.1']
    #allocation10 [shape = 'u8[512]{0}', space=vmem, size = 0x400, scoped, tag = 'output window, operand 0, single buffered']
    %10 = vsyncpa [#allocation3], 0
    %11 = vsyncpa [#allocation6], 0
    %12 = vsyncpa [#allocation9], 0
    %13 = vsyncpa [#allocation4], 0
    // Predicated region
    $region2: #{tpu_custom_call.1} parent=1 // pred_check
      _
    $region3: #{tpu_custom_call.1} parent=1 // pred_check_branch
      %15 = sbr.rel (0) target = $region5
    $region4: #{tpu_custom_call.1} parent=1 // pred_region
      %s17 = ssub.s32 112, 112
      %18 = vsyncadd [#allocation3], %s17
      %s20 = sshll.u32 [#allocation2], 4
      %s21 = int_to_ptr.vmem [resolvable:$true] %s20
      %23 = dma.hbm_to_vmem [thread:$0]  %s0, 112, %s21, [#allocation3]
    $region5: #{tpu_custom_call.1} parent=1 // pred_fallthru
      _
    // Predicated region
    $region6: #{tpu_custom_call.1} parent=1 // pred_check
      _
    $region7: #{tpu_custom_call.1} parent=1 // pred_check_branch
      %25 = sbr.rel (0) target = $region9
    $region8: #{tpu_custom_call.1} parent=1 // pred_region
      %s27 = ssub.s32 12544, 12544
      %28 = vsyncadd [#allocation6], %s27
      %s29 = sshll.u32 [#allocation5], 4
      %s30 = int_to_ptr.vmem [resolvable:$true] %s29
      %35 = dma.hbm_to_vmem [thread:$0]  %s1, 12544, %s30, [#allocation6], 128, 128, 8
    $region9: #{tpu_custom_call.1} parent=1 // pred_fallthru
      _
    // Predicated region
    $region10: #{tpu_custom_call.1} parent=1 // pred_check
      _
    $region11: #{tpu_custom_call.1} parent=1 // pred_check_branch
      %37 = sbr.rel (0) target = $region13
    $region12: #{tpu_custom_call.1} parent=1 // pred_region
      %s39 = ssub.s32 2048, 2048
      %40 = vsyncadd [#allocation6], %s39
      %s41 = sshll.u32 [#allocation7], 4
      %s42 = int_to_ptr.vmem [resolvable:$true] %s41
      %47 = dma.hbm_to_vmem [thread:$0]  %s2, 2048, %s42, [#allocation6], 64, 64, 4
    $region13: #{tpu_custom_call.1} parent=1 // pred_fallthru
      _
    // Predicated region
    $region14: #{tpu_custom_call.1} parent=1 // pred_check
      _
    $region15: #{tpu_custom_call.1} parent=1 // pred_check_branch
      %49 = sbr.rel (0) target = $region17
    $region16: #{tpu_custom_call.1} parent=1 // pred_region
      %s51 = ssub.s32 1024, 1024
      %52 = vsyncadd [#allocation9], %s51
      %s53 = sshll.u32 [#allocation8], 4
      %s54 = int_to_ptr.vmem [resolvable:$true] %s53
      %59 = dma.hbm_to_vmem [thread:$0]  %s3, 1024, %s54, [#allocation9], 64, 64, 4
    $region17: #{tpu_custom_call.1} parent=1 // pred_fallthru
      _
    // Predicated region
    $region18: #{tpu_custom_call.1} parent=1 // pred_check
      _
    $region19: #{tpu_custom_call.1} parent=1 // pred_check_branch
      %61 = sbr.rel (0) target = $region21
    $region20: #{tpu_custom_call.1} parent=1 // pred_region
      _
    $region21: #{tpu_custom_call.1} parent=1 // pred_fallthru
      _
    // Predicated region
    $region22: #{tpu_custom_call.1} parent=1 // pred_check
      _
    $region23: #{tpu_custom_call.1} parent=1 // pred_check_branch
      %63 = sbr.rel (0) target = $region25
    $region24: #{tpu_custom_call.1} parent=1 // pred_region
      %64 = dma.done [#allocation3], 112
    $region25: #{tpu_custom_call.1} parent=1 // pred_fallthru
      _
    // Predicated region
    $region26: #{tpu_custom_call.1} parent=1 // pred_check
      _
    $region27: #{tpu_custom_call.1} parent=1 // pred_check_branch
      %66 = sbr.rel (0) target = $region29
    $region28: #{tpu_custom_call.1} parent=1 // pred_region
      %67 = dma.done [#allocation6], 12544
    $region29: #{tpu_custom_call.1} parent=1 // pred_fallthru
      _
    // Predicated region
    $region30: #{tpu_custom_call.1} parent=1 // pred_check
      _
    $region31: #{tpu_custom_call.1} parent=1 // pred_check_branch
      %69 = sbr.rel (0) target = $region33
    $region32: #{tpu_custom_call.1} parent=1 // pred_region
      %70 = dma.done [#allocation6], 2048
    $region33: #{tpu_custom_call.1} parent=1 // pred_fallthru
      _
    // Predicated region
    $region34: #{tpu_custom_call.1} parent=1 // pred_check
      _
    $region35: #{tpu_custom_call.1} parent=1 // pred_check_branch
      %72 = sbr.rel (0) target = $region37
    $region36: #{tpu_custom_call.1} parent=1 // pred_region
      %73 = dma.done [#allocation9], 1024
    $region37: #{tpu_custom_call.1} parent=1 // pred_fallthru
      _
    %v75 = vld [vmem:[%s4] sm:$0xf]
    %v76 = vld [vmem:[#allocation2] sm:$0x7f]
    %v77 = vld [vmem:[#allocation5] sm:$0xff]
    %v78 = vld [vmem:[#allocation5 + $0x8] sm:$0xff]
    %v79 = vld [vmem:[#allocation5 + $0x10] sm:$0xff]
    %v80 = vld [vmem:[#allocation5 + $0x18] sm:$0xff]
    %v81 = vld [vmem:[#allocation5 + $0x20] sm:$0xff]
    %v82 = vld [vmem:[#allocation5 + $0x28] sm:$0xff]
    %v83 = vld [vmem:[#allocation5 + $0x30] sm:$0xff]
    %v84 = vld [vmem:[#allocation5 + $0x38] sm:$0xff]
    %v85 = vld [vmem:[#allocation5 + $0x40] sm:$0xff]
    %v86 = vld [vmem:[#allocation5 + $0x48] sm:$0xff]
    %v87 = vld [vmem:[#allocation5 + $0x50] sm:$0xff]
    %v88 = vld [vmem:[#allocation5 + $0x58] sm:$0xff]
    %v89 = vld [vmem:[#allocation5 + $0x60] sm:$0xff]
    %v90 = vld [vmem:[#allocation5 + $0x68] sm:$0xff]
    %v91 = vld [vmem:[#allocation5 + $0x70] sm:$0xff]
    %v92 = vld [vmem:[#allocation5 + $0x78] sm:$0xff]
    %v93 = vld [vmem:[#allocation5 + $0x80] sm:$0xff]
    %v94 = vld [vmem:[#allocation5 + $0x88] sm:$0xff]
    %v95 = vld [vmem:[#allocation5 + $0x90] sm:$0xff]
    %v96 = vld [vmem:[#allocation5 + $0x98] sm:$0xff]
    %v97 = vld [vmem:[#allocation5 + $0xa0] sm:$0xff]
    %v98 = vld [vmem:[#allocation5 + $0xa8] sm:$0xff]
    %v99 = vld [vmem:[#allocation5 + $0xb0] sm:$0xff]
    %v100 = vld [vmem:[#allocation5 + $0xb8] sm:$0xff]
    %v101 = vld [vmem:[#allocation5 + $0xc0] sm:$0xff]
    %v102 = vld [vmem:[#allocation5 + $0xc8] sm:$0xff]
    %v103 = vld [vmem:[#allocation5 + $0xd0] sm:$0xff]
    %v104 = vld [vmem:[#allocation5 + $0xd8] sm:$0xff]
    %v105 = vld [vmem:[#allocation5 + $0xe0] sm:$0xff]
    %v106 = vld [vmem:[#allocation5 + $0xe8] sm:$0xff]
    %v107 = vld [vmem:[#allocation5 + $0xf0] sm:$0xff]
    %v108 = vld [vmem:[#allocation5 + $0xf8] sm:$0xff]
    %v109 = vld [vmem:[#allocation5 + $0x100] sm:$0xff]
    %v110 = vld [vmem:[#allocation5 + $0x108] sm:$0xff]
    %v111 = vld [vmem:[#allocation5 + $0x110] sm:$0xff]
    %v112 = vld [vmem:[#allocation5 + $0x118] sm:$0xff]
    %v113 = vld [vmem:[#allocation5 + $0x120] sm:$0xff]
    %v114 = vld [vmem:[#allocation5 + $0x128] sm:$0xff]
    %v115 = vld [vmem:[#allocation5 + $0x130] sm:$0xff]
    %v116 = vld [vmem:[#allocation5 + $0x138] sm:$0xff]
    %v117 = vld [vmem:[#allocation5 + $0x140] sm:$0xff]
    %v118 = vld [vmem:[#allocation5 + $0x148] sm:$0xff]
    %v119 = vld [vmem:[#allocation5 + $0x150] sm:$0xff]
    %v120 = vld [vmem:[#allocation5 + $0x158] sm:$0xff]
    %v121 = vld [vmem:[#allocation5 + $0x160] sm:$0xff]
    %v122 = vld [vmem:[#allocation5 + $0x168] sm:$0xff]
    %v123 = vld [vmem:[#allocation5 + $0x170] sm:$0xff]
    %v124 = vld [vmem:[#allocation5 + $0x178] sm:$0xff]
    %v125 = vld [vmem:[#allocation5 + $0x180] sm:$0xff]
    %v126 = vld [vmem:[#allocation5 + $0x188] sm:$0xff]
    %v127 = vld [vmem:[#allocation5 + $0x190] sm:$0xff]
    %v128 = vld [vmem:[#allocation5 + $0x198] sm:$0xff]
    %v129 = vld [vmem:[#allocation5 + $0x1a0] sm:$0xff]
    %v130 = vld [vmem:[#allocation5 + $0x1a8] sm:$0xff]
    %v131 = vld [vmem:[#allocation5 + $0x1b0] sm:$0xff]
    %v132 = vld [vmem:[#allocation5 + $0x1b8] sm:$0xff]
    %v133 = vld [vmem:[#allocation5 + $0x1c0] sm:$0xff]
    %v134 = vld [vmem:[#allocation5 + $0x1c8] sm:$0xff]
    %v135 = vld [vmem:[#allocation5 + $0x1d0] sm:$0xff]
    %v136 = vld [vmem:[#allocation5 + $0x1d8] sm:$0xff]
    %v137 = vld [vmem:[#allocation5 + $0x1e0] sm:$0xff]
    %v138 = vld [vmem:[#allocation5 + $0x1e8] sm:$0xff]
    %v139 = vld [vmem:[#allocation5 + $0x1f0] sm:$0xff]
    %v140 = vld [vmem:[#allocation5 + $0x1f8] sm:$0xff]
    %v141 = vld [vmem:[#allocation5 + $0x200] sm:$0xff]
    %v142 = vld [vmem:[#allocation5 + $0x208] sm:$0xff]
    %v143 = vld [vmem:[#allocation5 + $0x210] sm:$0xff]
    %v144 = vld [vmem:[#allocation5 + $0x218] sm:$0xff]
    %v145 = vld [vmem:[#allocation5 + $0x220] sm:$0xff]
    %v146 = vld [vmem:[#allocation5 + $0x228] sm:$0xff]
    %v147 = vld [vmem:[#allocation5 + $0x230] sm:$0xff]
    %v148 = vld [vmem:[#allocation5 + $0x238] sm:$0xff]
    %v149 = vld [vmem:[#allocation5 + $0x240] sm:$0xff]
    %v150 = vld [vmem:[#allocation5 + $0x248] sm:$0xff]
    %v151 = vld [vmem:[#allocation5 + $0x250] sm:$0xff]
    %v152 = vld [vmem:[#allocation5 + $0x258] sm:$0xff]
    %v153 = vld [vmem:[#allocation5 + $0x260] sm:$0xff]
    %v154 = vld [vmem:[#allocation5 + $0x268] sm:$0xff]
    %v155 = vld [vmem:[#allocation5 + $0x270] sm:$0xff]
    %v156 = vld [vmem:[#allocation5 + $0x278] sm:$0xff]
    %v157 = vld [vmem:[#allocation5 + $0x280] sm:$0xff]
    %v158 = vld [vmem:[#allocation5 + $0x288] sm:$0xff]
    %v159 = vld [vmem:[#allocation5 + $0x290] sm:$0xff]
    %v160 = vld [vmem:[#allocation5 + $0x298] sm:$0xff]
    %v161 = vld [vmem:[#allocation5 + $0x2a0] sm:$0xff]
    %v162 = vld [vmem:[#allocation5 + $0x2a8] sm:$0xff]
    %v163 = vld [vmem:[#allocation5 + $0x2b0] sm:$0xff]
    %v164 = vld [vmem:[#allocation5 + $0x2b8] sm:$0xff]
    %v165 = vld [vmem:[#allocation5 + $0x2c0] sm:$0xff]
    %v166 = vld [vmem:[#allocation5 + $0x2c8] sm:$0xff]
    %v167 = vld [vmem:[#allocation5 + $0x2d0] sm:$0xff]
    %v168 = vld [vmem:[#allocation5 + $0x2d8] sm:$0xff]
    %v169 = vld [vmem:[#allocation5 + $0x2e0] sm:$0xff]
    %v170 = vld [vmem:[#allocation5 + $0x2e8] sm:$0xff]
    %v171 = vld [vmem:[#allocation5 + $0x2f0] sm:$0xff]
    %v172 = vld [vmem:[#allocation5 + $0x2f8] sm:$0xff]
    %v173 = vld [vmem:[#allocation5 + $0x300] sm:$0xff]
    %v174 = vld [vmem:[#allocation5 + $0x308] sm:$0xff]
    %v176 = vcombine.high %v76, %v76
    %v178 = vunpack.c.l.s4 1966171168
    %v179 = vunpack.c.0.s8 %v178
    %v180 = vlaneseq
    %v181 = vshrl.u32 %v180, 7
    %v182 = vsub.s32 %v179, %v181
    %v183 = vrot.slane %v76, %v182
    %v185 = vunpack.c.l.s4 1966171168
    %v186 = vunpack.c.0.s8 %v185
    %v187 = vlaneseq
    %v188 = vshrl.u32 %v187, 7
    %v189 = vsub.s32 %v186, %v188
    %v190 = vrot.slane %v176, %v189
    %v191 = vcombine.high %v183, %v183
    %v192 = vcombine.high %v190, %v190
    %v194 = vunpack.c.l.s4 1966171168
    %v195 = vunpack.c.0.s8 %v194
    %v196 = vlaneseq
    %v197 = vshrl.u32 %v196, 7
    %v198 = vsub.s32 %v195, %v197
    %v199 = vrot.slane %v183, %v198
    %v201 = vunpack.c.l.s4 1966171168
    %v202 = vunpack.c.0.s8 %v201
    %v203 = vlaneseq
    %v204 = vshrl.u32 %v203, 7
    %v205 = vsub.s32 %v202, %v204
    %v206 = vrot.slane %v190, %v205
    %v208 = vunpack.c.l.s4 1966171168
    %v209 = vunpack.c.0.s8 %v208
    %v210 = vlaneseq
    %v211 = vshrl.u32 %v210, 7
    %v212 = vsub.s32 %v209, %v211
    %v213 = vrot.slane %v191, %v212
    %v215 = vunpack.c.l.s4 1966171168
    %v216 = vunpack.c.0.s8 %v215
    %v217 = vlaneseq
    %v218 = vshrl.u32 %v217, 7
    %v219 = vsub.s32 %v216, %v218
    %v220 = vrot.slane %v192, %v219
    %v221 = vcombine.high %v199, %v199
    %v222 = vcombine.high %v206, %v206
    %v223 = vcombine.high %v213, %v213
    %v328 = vunpack.c.l.b16 %v77
    %v329 = vunpack.c.h.b16 %v77
    %v330 = vunpack.c.l.b16 %v78
    %v331 = vunpack.c.h.b16 %v78
    %v332 = vunpack.c.l.b16 %v79
    %v333 = vunpack.c.h.b16 %v79
    %v334 = vunpack.c.l.b16 %v80
    %v335 = vunpack.c.h.b16 %v80
    %v336 = vunpack.c.l.b16 %v81
    %v337 = vunpack.c.h.b16 %v81
    %v338 = vunpack.c.l.b16 %v82
    %v339 = vunpack.c.h.b16 %v82
    %v340 = vunpack.c.l.b16 %v83
    %v341 = vunpack.c.h.b16 %v83
    %v342 = vunpack.c.l.b16 %v84
    %v343 = vunpack.c.h.b16 %v84
    %v344 = vunpack.c.l.b16 %v85
    %v345 = vunpack.c.h.b16 %v85
    %v346 = vunpack.c.l.b16 %v86
    %v347 = vunpack.c.h.b16 %v86
    %v348 = vunpack.c.l.b16 %v87
    %v349 = vunpack.c.h.b16 %v87
    %v350 = vunpack.c.l.b16 %v88
    %v351 = vunpack.c.h.b16 %v88
    %v352 = vunpack.c.l.b16 %v89
    %v353 = vunpack.c.h.b16 %v89
    %v354 = vunpack.c.l.b16 %v90
    %v355 = vunpack.c.h.b16 %v90
    %v356 = vunpack.c.l.b16 %v91
    %v357 = vunpack.c.h.b16 %v91
    %v358 = vunpack.c.l.b16 %v92
    %v359 = vunpack.c.h.b16 %v92
    %v360 = vunpack.c.l.b16 %v93
    %v361 = vunpack.c.h.b16 %v93
    %v362 = vunpack.c.l.b16 %v94
    %v363 = vunpack.c.h.b16 %v94
    %v364 = vunpack.c.l.b16 %v95
    %v365 = vunpack.c.h.b16 %v95
    %v366 = vunpack.c.l.b16 %v96
    %v367 = vunpack.c.h.b16 %v96
    %v368 = vunpack.c.l.b16 %v97
    %v369 = vunpack.c.h.b16 %v97
    %v370 = vunpack.c.l.b16 %v98
    %v371 = vunpack.c.h.b16 %v98
    %v372 = vunpack.c.l.b16 %v99
    %v373 = vunpack.c.h.b16 %v99
    %v374 = vunpack.c.l.b16 %v100
    %v375 = vunpack.c.h.b16 %v100
    %v376 = vunpack.c.l.b16 %v101
    %v377 = vunpack.c.h.b16 %v101
    %v378 = vunpack.c.l.b16 %v102
    %v379 = vunpack.c.h.b16 %v102
    %v380 = vunpack.c.l.b16 %v103
    %v381 = vunpack.c.h.b16 %v103
    %v382 = vunpack.c.l.b16 %v104
    %v383 = vunpack.c.h.b16 %v104
    %v384 = vunpack.c.l.b16 %v105
    %v385 = vunpack.c.h.b16 %v105
    %v386 = vunpack.c.l.b16 %v106
    %v387 = vunpack.c.h.b16 %v106
    %v388 = vunpack.c.l.b16 %v107
    %v389 = vunpack.c.h.b16 %v107
    %v390 = vunpack.c.l.b16 %v108
    %v391 = vunpack.c.h.b16 %v108
    %v392 = vunpack.c.l.b16 %v109
    %v393 = vunpack.c.h.b16 %v109
    %v394 = vunpack.c.l.b16 %v110
    %v395 = vunpack.c.h.b16 %v110
    %v396 = vunpack.c.l.b16 %v111
    %v397 = vunpack.c.h.b16 %v111
    %v398 = vunpack.c.l.b16 %v112
    %v399 = vunpack.c.h.b16 %v112
    %v400 = vunpack.c.l.b16 %v113
    %v401 = vunpack.c.h.b16 %v113
    %v402 = vunpack.c.l.b16 %v114
    %v403 = vunpack.c.h.b16 %v114
    %v404 = vunpack.c.l.b16 %v115
    %v405 = vunpack.c.h.b16 %v115
    %v406 = vunpack.c.l.b16 %v116
    %v407 = vunpack.c.h.b16 %v116
    %v408 = vunpack.c.l.b16 %v117
    %v409 = vunpack.c.h.b16 %v117
    %v410 = vunpack.c.l.b16 %v118
    %v411 = vunpack.c.h.b16 %v118
    %v412 = vunpack.c.l.b16 %v119
    %v413 = vunpack.c.h.b16 %v119
    %v414 = vunpack.c.l.b16 %v120
    %v415 = vunpack.c.h.b16 %v120
    %v416 = vunpack.c.l.b16 %v121
    %v417 = vunpack.c.h.b16 %v121
    %v418 = vunpack.c.l.b16 %v122
    %v419 = vunpack.c.h.b16 %v122
    %v420 = vunpack.c.l.b16 %v123
    %v421 = vunpack.c.h.b16 %v123
    %v422 = vunpack.c.l.b16 %v124
    %v423 = vunpack.c.h.b16 %v124
    %v424 = vunpack.c.l.b16 %v125
    %v425 = vunpack.c.h.b16 %v125
    %v426 = vunpack.c.l.b16 %v126
    %v427 = vunpack.c.h.b16 %v126
    %v428 = vunpack.c.l.b16 %v127
    %v429 = vunpack.c.h.b16 %v127
    %v430 = vunpack.c.l.b16 %v128
    %v431 = vunpack.c.h.b16 %v128
    %v432 = vunpack.c.l.b16 %v129
    %v433 = vunpack.c.h.b16 %v129
    %v434 = vunpack.c.l.b16 %v130
    %v435 = vunpack.c.h.b16 %v130
    %v436 = vunpack.c.l.b16 %v131
    %v437 = vunpack.c.h.b16 %v131
    %v438 = vunpack.c.l.b16 %v132
    %v439 = vunpack.c.h.b16 %v132
    %v440 = vunpack.c.l.b16 %v133
    %v441 = vunpack.c.h.b16 %v133
    %v442 = vunpack.c.l.b16 %v134
    %v443 = vunpack.c.h.b16 %v134
    %v444 = vunpack.c.l.b16 %v135
    %v445 = vunpack.c.h.b16 %v135
    %v446 = vunpack.c.l.b16 %v136
    %v447 = vunpack.c.h.b16 %v136
    %v448 = vunpack.c.l.b16 %v137
    %v449 = vunpack.c.h.b16 %v137
    %v450 = vunpack.c.l.b16 %v138
    %v451 = vunpack.c.h.b16 %v138
    %v452 = vunpack.c.l.b16 %v139
    %v453 = vunpack.c.h.b16 %v139
    %v454 = vunpack.c.l.b16 %v140
    %v455 = vunpack.c.h.b16 %v140
    %v456 = vunpack.c.l.b16 %v141
    %v457 = vunpack.c.h.b16 %v141
    %v458 = vunpack.c.l.b16 %v142
    %v459 = vunpack.c.h.b16 %v142
    %v460 = vunpack.c.l.b16 %v143
    %v461 = vunpack.c.h.b16 %v143
    %v462 = vunpack.c.l.b16 %v144
    %v463 = vunpack.c.h.b16 %v144
    %v464 = vunpack.c.l.b16 %v145
    %v465 = vunpack.c.h.b16 %v145
    %v466 = vunpack.c.l.b16 %v146
    %v467 = vunpack.c.h.b16 %v146
    %v468 = vunpack.c.l.b16 %v147
    %v469 = vunpack.c.h.b16 %v147
    %v470 = vunpack.c.l.b16 %v148
    %v471 = vunpack.c.h.b16 %v148
    %v472 = vunpack.c.l.b16 %v149
    %v473 = vunpack.c.h.b16 %v149
    %v474 = vunpack.c.l.b16 %v150
    %v475 = vunpack.c.h.b16 %v150
    %v476 = vunpack.c.l.b16 %v151
    %v477 = vunpack.c.h.b16 %v151
    %v478 = vunpack.c.l.b16 %v152
    %v479 = vunpack.c.h.b16 %v152
    %v480 = vunpack.c.l.b16 %v153
    %v481 = vunpack.c.h.b16 %v153
    %v482 = vunpack.c.l.b16 %v154
    %v483 = vunpack.c.h.b16 %v154
    %v484 = vunpack.c.l.b16 %v155
    %v485 = vunpack.c.h.b16 %v155
    %v486 = vunpack.c.l.b16 %v156
    %v487 = vunpack.c.h.b16 %v156
    %v488 = vunpack.c.l.b16 %v157
    %v489 = vunpack.c.h.b16 %v157
    %v490 = vunpack.c.l.b16 %v158
    %v491 = vunpack.c.h.b16 %v158
    %v492 = vunpack.c.l.b16 %v159
    %v493 = vunpack.c.h.b16 %v159
    %v494 = vunpack.c.l.b16 %v160
    %v495 = vunpack.c.h.b16 %v160
    %v496 = vunpack.c.l.b16 %v161
    %v497 = vunpack.c.h.b16 %v161
    %v498 = vunpack.c.l.b16 %v162
    %v499 = vunpack.c.h.b16 %v162
    %v500 = vunpack.c.l.b16 %v163
    %v501 = vunpack.c.h.b16 %v163
    %v502 = vunpack.c.l.b16 %v164
    %v503 = vunpack.c.h.b16 %v164
    %v504 = vunpack.c.l.b16 %v165
    %v505 = vunpack.c.h.b16 %v165
    %v506 = vunpack.c.l.b16 %v166
    %v507 = vunpack.c.h.b16 %v166
    %v508 = vunpack.c.l.b16 %v167
    %v509 = vunpack.c.h.b16 %v167
    %v510 = vunpack.c.l.b16 %v168
    %v511 = vunpack.c.h.b16 %v168
    %v512 = vunpack.c.l.b16 %v169
    %v513 = vunpack.c.h.b16 %v169
    %v514 = vunpack.c.l.b16 %v170
    %v515 = vunpack.c.h.b16 %v170
    %v516 = vunpack.c.l.b16 %v171
    %v517 = vunpack.c.h.b16 %v171
    %v518 = vunpack.c.l.b16 %v172
    %v519 = vunpack.c.h.b16 %v172
    %v520 = vunpack.c.l.b16 %v173
    %v521 = vunpack.c.h.b16 %v173
    %v522 = vunpack.c.l.b16 %v174
    %v523 = vunpack.c.h.b16 %v174
    %v524 = vpack.c.b16 %v330, %v328
    %v525 = vpack.c.b16 %v331, %v329
    %v526 = vpack.c.b16 %v334, %v332
    %v527 = vpack.c.b16 %v335, %v333
    %v528 = vpack.c.b16 %v338, %v336
    %v529 = vpack.c.b16 %v339, %v337
    %v530 = vpack.c.b16 %v342, %v340
    %v531 = vpack.c.b16 %v343, %v341
    %v532 = vpack.c.b16 %v346, %v344
    %v533 = vpack.c.b16 %v347, %v345
    %v534 = vpack.c.b16 %v350, %v348
    %v535 = vpack.c.b16 %v351, %v349
    %v536 = vpack.c.b16 %v354, %v352
    %v537 = vpack.c.b16 %v355, %v353
    %v538 = vpack.c.b16 %v358, %v356
    %v539 = vpack.c.b16 %v359, %v357
    %v540 = vpack.c.b16 %v362, %v360
    %v541 = vpack.c.b16 %v363, %v361
    %v542 = vpack.c.b16 %v366, %v364
    %v543 = vpack.c.b16 %v367, %v365
    %v544 = vpack.c.b16 %v370, %v368
    %v545 = vpack.c.b16 %v371, %v369
    %v546 = vpack.c.b16 %v374, %v372
    %v547 = vpack.c.b16 %v375, %v373
    %v548 = vpack.c.b16 %v378, %v376
    %v549 = vpack.c.b16 %v379, %v377
    %v550 = vpack.c.b16 %v382, %v380
    %v551 = vpack.c.b16 %v383, %v381
    %v552 = vpack.c.b16 %v386, %v384
    %v553 = vpack.c.b16 %v387, %v385
    %v554 = vpack.c.b16 %v390, %v388
    %v555 = vpack.c.b16 %v391, %v389
    %v556 = vpack.c.b16 %v394, %v392
    %v557 = vpack.c.b16 %v395, %v393
    %v558 = vpack.c.b16 %v398, %v396
    %v559 = vpack.c.b16 %v399, %v397
    %v560 = vpack.c.b16 %v402, %v400
    %v561 = vpack.c.b16 %v403, %v401
    %v562 = vpack.c.b16 %v406, %v404
    %v563 = vpack.c.b16 %v407, %v405
    %v564 = vpack.c.b16 %v410, %v408
    %v565 = vpack.c.b16 %v411, %v409
    %v566 = vpack.c.b16 %v414, %v412
    %v567 = vpack.c.b16 %v415, %v413
    %v568 = vpack.c.b16 %v418, %v416
    %v569 = vpack.c.b16 %v419, %v417
    %v570 = vpack.c.b16 %v422, %v420
    %v571 = vpack.c.b16 %v423, %v421
    %v572 = vpack.c.b16 %v426, %v424
    %v573 = vpack.c.b16 %v427, %v425
    %v574 = vpack.c.b16 %v430, %v428
    %v575 = vpack.c.b16 %v431, %v429
    %v576 = vpack.c.b16 %v434, %v432
    %v577 = vpack.c.b16 %v435, %v433
    %v578 = vpack.c.b16 %v438, %v436
    %v579 = vpack.c.b16 %v439, %v437
    %v580 = vpack.c.b16 %v442, %v440
    %v581 = vpack.c.b16 %v443, %v441
    %v582 = vpack.c.b16 %v446, %v444
    %v583 = vpack.c.b16 %v447, %v445
    %v584 = vpack.c.b16 %v450, %v448
    %v585 = vpack.c.b16 %v451, %v449
    %v586 = vpack.c.b16 %v454, %v452
    %v587 = vpack.c.b16 %v455, %v453
    %v588 = vpack.c.b16 %v458, %v456
    %v589 = vpack.c.b16 %v459, %v457
    %v590 = vpack.c.b16 %v462, %v460
    %v591 = vpack.c.b16 %v463, %v461
    %v592 = vpack.c.b16 %v466, %v464
    %v593 = vpack.c.b16 %v467, %v465
    %v594 = vpack.c.b16 %v470, %v468
    %v595 = vpack.c.b16 %v471, %v469
    %v596 = vpack.c.b16 %v474, %v472
    %v597 = vpack.c.b16 %v475, %v473
    %v598 = vpack.c.b16 %v478, %v476
    %v599 = vpack.c.b16 %v479, %v477
    %v600 = vpack.c.b16 %v482, %v480
    %v601 = vpack.c.b16 %v483, %v481
    %v602 = vpack.c.b16 %v486, %v484
    %v603 = vpack.c.b16 %v487, %v485
    %v604 = vpack.c.b16 %v490, %v488
    %v605 = vpack.c.b16 %v491, %v489
    %v606 = vpack.c.b16 %v494, %v492
    %v607 = vpack.c.b16 %v495, %v493
    %v608 = vpack.c.b16 %v498, %v496
    %v609 = vpack.c.b16 %v499, %v497
    %v610 = vpack.c.b16 %v502, %v500
    %v611 = vpack.c.b16 %v503, %v501
    %v612 = vpack.c.b16 %v506, %v504
    %v613 = vpack.c.b16 %v507, %v505
    %v614 = vpack.c.b16 %v510, %v508
    %v615 = vpack.c.b16 %v511, %v509
    %v616 = vpack.c.b16 %v514, %v512
    %v617 = vpack.c.b16 %v515, %v513
    %v618 = vpack.c.b16 %v518, %v516
    %v619 = vpack.c.b16 %v519, %v517
    %v620 = vpack.c.b16 %v522, %v520
    %v621 = vpack.c.b16 %v523, %v521
    %v721 = vlaneseq
    %v722 = vshrl.u32 %v721, 7
    %v723 = vsub.s32 0, %v722
    %v724 = vrot.slane %v75, %v723
    %v725 = vlaneseq
    %v726 = vshrl.u32 %v725, 7
    %v727 = vsub.s32 1, %v726
    %v728 = vrot.slane %v75, %v727
    %vm731 = vcmask 130048
    %v733 = vsel %vm731, %v222, 0
    %735 = vmatprep.subr.bf16.mxu0 %v525
    %736 = vmatpush1.bf16.msra.mxu0 %v524
    %737 = vmatprep.subr.bf16.mxu0 %v527
    %738 = vmatpush1.bf16.msra.mxu0 %v526
    %739 = vmatprep.subr.bf16.mxu0 %v529
    %740 = vmatpush1.bf16.msra.mxu0 %v528
    %741 = vmatprep.subr.bf16.mxu0 %v531
    %742 = vmatpush1.bf16.msra.mxu0 %v530
    %743 = vmatprep.subr.bf16.mxu0 %v533
    %744 = vmatpush1.bf16.msra.mxu0 %v532
    %745 = vmatprep.subr.bf16.mxu0 %v535
    %746 = vmatpush1.bf16.msra.mxu0 %v534
    %747 = vmatprep.subr.bf16.mxu0 %v537
    %748 = vmatpush1.bf16.msra.mxu0 %v536
    %749 = vmatprep.subr.bf16.mxu0 %v539
    %750 = vmatpush1.bf16.msra.mxu0 %v538
    %751 = vmatprep.subr.bf16.mxu0 %v541
    %752 = vmatpush1.bf16.msra.mxu0 %v540
    %753 = vmatprep.subr.bf16.mxu0 %v543
    %754 = vmatpush1.bf16.msra.mxu0 %v542
    %755 = vmatprep.subr.bf16.mxu0 %v545
    %756 = vmatpush1.bf16.msra.mxu0 %v544
    %757 = vmatprep.subr.bf16.mxu0 %v547
    %758 = vmatpush1.bf16.msra.mxu0 %v546
    %759 = vmatprep.subr.bf16.mxu0 %v549
    %760 = vmatpush1.bf16.msra.mxu0 %v548
    %761 = vmatprep.subr.bf16.mxu0 %v551
    %762 = vmatpush1.bf16.msra.mxu0 %v550
    %763 = vmatprep.subr.bf16.mxu0 %v553
    %764 = vmatpush1.bf16.msra.mxu0 %v552
    %765 = vmatprep.subr.bf16.mxu0 %v555
    %766 = vmatpush1.bf16.msra.mxu0 %v554
    %767 = vmatprep.mubr.bf16.mxu0 %v213
    %768 = vmatmul.mubr.bf16.gmra.mrb[0].mxu0 %v199
    %v769 = vpop.f32.mrb[0].mxu0
    %v770 = vadd.f32 %v724, %v769
    %v771 = vpop.f32.mrb[0].mxu0
    %v772 = vadd.f32 %v728, %v771
    %v773 = vpop.f32.mrb[0].mxu0
    %v774 = vpop.f32.mrb[0].mxu0
    %775 = vdwg.mxu0
    %776 = vmatprep.subr.bf16.mxu0 %v557
    %777 = vmatpush1.bf16.msra.mxu0 %v556
    %778 = vmatprep.subr.bf16.mxu0 %v559
    %779 = vmatpush1.bf16.msra.mxu0 %v558
    %780 = vmatprep.subr.bf16.mxu0 %v561
    %781 = vmatpush1.bf16.msra.mxu0 %v560
    %782 = vmatprep.subr.bf16.mxu0 %v563
    %783 = vmatpush1.bf16.msra.mxu0 %v562
    %784 = vmatprep.subr.bf16.mxu0 %v565
    %785 = vmatpush1.bf16.msra.mxu0 %v564
    %786 = vmatprep.subr.bf16.mxu0 %v567
    %787 = vmatpush1.bf16.msra.mxu0 %v566
    %788 = vmatprep.subr.bf16.mxu0 %v569
    %789 = vmatpush1.bf16.msra.mxu0 %v568
    %790 = vmatprep.subr.bf16.mxu0 %v571
    %791 = vmatpush1.bf16.msra.mxu0 %v570
    %792 = vmatprep.subr.bf16.mxu0 %v573
    %793 = vmatpush1.bf16.msra.mxu0 %v572
    %794 = vmatprep.subr.bf16.mxu0 %v575
    %795 = vmatpush1.bf16.msra.mxu0 %v574
    %796 = vmatprep.subr.bf16.mxu0 %v577
    %797 = vmatpush1.bf16.msra.mxu0 %v576
    %798 = vmatprep.subr.bf16.mxu0 %v579
    %799 = vmatpush1.bf16.msra.mxu0 %v578
    %800 = vmatprep.subr.bf16.mxu0 %v581
    %801 = vmatpush1.bf16.msra.mxu0 %v580
    %802 = vmatprep.subr.bf16.mxu0 %v583
    %803 = vmatpush1.bf16.msra.mxu0 %v582
    %804 = vmatprep.subr.bf16.mxu0 %v585
    %805 = vmatpush1.bf16.msra.mxu0 %v584
    %806 = vmatprep.subr.bf16.mxu0 %v587
    %807 = vmatpush1.bf16.msra.mxu0 %v586
    %808 = vmatprep.mubr.bf16.mxu0 %v223
    %809 = vmatmul.mubr.bf16.gmra.mrb[0].mxu0 %v221
    %v810 = vpop.f32.mrb[0].mxu0
    %v811 = vadd.f32 %v770, %v810
    %v812 = vpop.f32.mrb[0].mxu0
    %v813 = vadd.f32 %v772, %v812
    %v814 = vpop.f32.mrb[0].mxu0
    %v815 = vpop.f32.mrb[0].mxu0
    %816 = vdwg.mxu0
    %817 = vmatprep.subr.bf16.mxu0 %v589
    %818 = vmatpush1.bf16.msra.mxu0 %v588
    %819 = vmatprep.subr.bf16.mxu0 %v591
    %820 = vmatpush1.bf16.msra.mxu0 %v590
    %821 = vmatprep.subr.bf16.mxu0 %v593
    %822 = vmatpush1.bf16.msra.mxu0 %v592
    %823 = vmatprep.subr.bf16.mxu0 %v595
    %824 = vmatpush1.bf16.msra.mxu0 %v594
    %825 = vmatprep.subr.bf16.mxu0 %v597
    %826 = vmatpush1.bf16.msra.mxu0 %v596
    %827 = vmatprep.subr.bf16.mxu0 %v599
    %828 = vmatpush1.bf16.msra.mxu0 %v598
    %829 = vmatprep.subr.bf16.mxu0 %v601
    %830 = vmatpush1.bf16.msra.mxu0 %v600
    %831 = vmatprep.subr.bf16.mxu0 %v603
    %832 = vmatpush1.bf16.msra.mxu0 %v602
    %833 = vmatprep.subr.bf16.mxu0 %v605
    %834 = vmatpush1.bf16.msra.mxu0 %v604
    %835 = vmatprep.subr.bf16.mxu0 %v607
    %836 = vmatpush1.bf16.msra.mxu0 %v606
    %837 = vmatprep.subr.bf16.mxu0 %v609
    %838 = vmatpush1.bf16.msra.mxu0 %v608
    %839 = vmatprep.subr.bf16.mxu0 %v611
    %840 = vmatpush1.bf16.msra.mxu0 %v610
    %841 = vmatprep.subr.bf16.mxu0 %v613
    %842 = vmatpush1.bf16.msra.mxu0 %v612
    %843 = vmatprep.subr.bf16.mxu0 %v615
    %844 = vmatpush1.bf16.msra.mxu0 %v614
    %845 = vmatprep.subr.bf16.mxu0 %v617
    %846 = vmatpush1.bf16.msra.mxu0 %v616
    %847 = vmatprep.subr.bf16.mxu0 %v619
    %848 = vmatpush1.bf16.msra.mxu0 %v618
    %849 = vmatprep.mubr.bf16.mxu0 %v220
    %850 = vmatmul.mubr.bf16.gmra.mrb[0].mxu0 %v206
    %v851 = vpop.f32.mrb[0].mxu0
    %v852 = vadd.f32 %v811, %v851
    %v853 = vpop.f32.mrb[0].mxu0
    %v854 = vadd.f32 %v813, %v853
    %v855 = vpop.f32.mrb[0].mxu0
    %v856 = vpop.f32.mrb[0].mxu0
    %857 = vdwg.mxu0
    %858 = vmatprep.subr.bf16.mxu0 %v621
    %859 = vmatpush1.bf16.msra.mxu0 %v620
    %860 = vmatprep.subr.bf16.mxu0 0
    %861 = vmatpush1.bf16.msra.mxu0 0
    %862 = vmatprep.subr.bf16.mxu0 0
    %863 = vmatpush1.bf16.msra.mxu0 0
    %864 = vmatprep.subr.bf16.mxu0 0
    %865 = vmatpush1.bf16.msra.mxu0 0
    %866 = vmatprep.subr.bf16.mxu0 0
    %867 = vmatpush1.bf16.msra.mxu0 0
    %868 = vmatprep.subr.bf16.mxu0 0
    %869 = vmatpush1.bf16.msra.mxu0 0
    %870 = vmatprep.subr.bf16.mxu0 0
    %871 = vmatpush1.bf16.msra.mxu0 0
    %872 = vmatprep.subr.bf16.mxu0 0
    %873 = vmatpush1.bf16.msra.mxu0 0
    %874 = vmatprep.subr.bf16.mxu0 0
    %875 = vmatpush1.bf16.msra.mxu0 0
    %876 = vmatprep.subr.bf16.mxu0 0
    %877 = vmatpush1.bf16.msra.mxu0 0
    %878 = vmatprep.subr.bf16.mxu0 0
    %879 = vmatpush1.bf16.msra.mxu0 0
    %880 = vmatprep.subr.bf16.mxu0 0
    %881 = vmatpush1.bf16.msra.mxu0 0
    %882 = vmatprep.subr.bf16.mxu0 0
    %883 = vmatpush1.bf16.msra.mxu0 0
    %884 = vmatprep.subr.bf16.mxu0 0
    %885 = vmatpush1.bf16.msra.mxu0 0
    %886 = vmatprep.subr.bf16.mxu0 0
    %887 = vmatpush1.bf16.msra.mxu0 0
    %888 = vmatprep.subr.bf16.mxu0 0
    %889 = vmatpush1.bf16.msra.mxu0 0
    %890 = vmatprep.mubr.bf16.mxu0 0
    %891 = vmatmul.mubr.bf16.gmra.mrb[0].mxu0 %v733
    %v892 = vpop.f32.mrb[0].mxu0
    %v893 = vadd.f32 %v852, %v892
    %v894 = vpop.f32.mrb[0].mxu0
    %v895 = vadd.f32 %v854, %v894
    %v896 = vpop.f32.mrb[0].mxu0
    %v897 = vpop.f32.mrb[0].mxu0
    %898 = vdwg.mxu0
    %v899 = vmax.f32 %v893, 0.0
    %v900 = vmax.f32 %v895, 0.0
    %v901 = vpack.c.bf16 %v899, %v899
    %v902 = vpack.c.bf16 %v900, %v900
    %v903 = vld [vmem:[#allocation7] sm:$0xf]
    %v904 = vld [vmem:[#allocation7 + $0x4] sm:$0xf]
    %v905 = vld [vmem:[#allocation7 + $0x8] sm:$0xf]
    %v906 = vld [vmem:[#allocation7 + $0xc] sm:$0xf]
    %v907 = vld [vmem:[#allocation7 + $0x10] sm:$0xf]
    %v908 = vld [vmem:[#allocation7 + $0x14] sm:$0xf]
    %v909 = vld [vmem:[#allocation7 + $0x18] sm:$0xf]
    %v910 = vld [vmem:[#allocation7 + $0x1c] sm:$0xf]
    %v911 = vld [vmem:[#allocation7 + $0x20] sm:$0xf]
    %v912 = vld [vmem:[#allocation7 + $0x24] sm:$0xf]
    %v913 = vld [vmem:[#allocation7 + $0x28] sm:$0xf]
    %v914 = vld [vmem:[#allocation7 + $0x2c] sm:$0xf]
    %v915 = vld [vmem:[#allocation7 + $0x30] sm:$0xf]
    %v916 = vld [vmem:[#allocation7 + $0x34] sm:$0xf]
    %v917 = vld [vmem:[#allocation7 + $0x38] sm:$0xf]
    %v918 = vld [vmem:[#allocation7 + $0x3c] sm:$0xf]
    %v919 = vld [vmem:[#allocation7 + $0x40] sm:$0xf]
    %v920 = vld [vmem:[#allocation7 + $0x44] sm:$0xf]
    %v921 = vld [vmem:[#allocation7 + $0x48] sm:$0xf]
    %v922 = vld [vmem:[#allocation7 + $0x4c] sm:$0xf]
    %v923 = vld [vmem:[#allocation7 + $0x50] sm:$0xf]
    %v924 = vld [vmem:[#allocation7 + $0x54] sm:$0xf]
    %v925 = vld [vmem:[#allocation7 + $0x58] sm:$0xf]
    %v926 = vld [vmem:[#allocation7 + $0x5c] sm:$0xf]
    %v927 = vld [vmem:[#allocation7 + $0x60] sm:$0xf]
    %v928 = vld [vmem:[#allocation7 + $0x64] sm:$0xf]
    %v929 = vld [vmem:[#allocation7 + $0x68] sm:$0xf]
    %v930 = vld [vmem:[#allocation7 + $0x6c] sm:$0xf]
    %v931 = vld [vmem:[#allocation7 + $0x70] sm:$0xf]
    %v932 = vld [vmem:[#allocation7 + $0x74] sm:$0xf]
    %v933 = vld [vmem:[#allocation7 + $0x78] sm:$0xf]
    %v934 = vld [vmem:[#allocation7 + $0x7c] sm:$0xf]
    %v967 = vunpack.c.l.b16 %v903
    %v968 = vunpack.c.l.b16 %v904
    %v969 = vunpack.c.l.b16 %v905
    %v970 = vunpack.c.l.b16 %v906
    %v971 = vunpack.c.l.b16 %v907
    %v972 = vunpack.c.l.b16 %v908
    %v973 = vunpack.c.l.b16 %v909
    %v974 = vunpack.c.l.b16 %v910
    %v975 = vunpack.c.l.b16 %v911
    %v976 = vunpack.c.l.b16 %v912
    %v977 = vunpack.c.l.b16 %v913
    %v978 = vunpack.c.l.b16 %v914
    %v979 = vunpack.c.l.b16 %v915
    %v980 = vunpack.c.l.b16 %v916
    %v981 = vunpack.c.l.b16 %v917
    %v982 = vunpack.c.l.b16 %v918
    %v983 = vunpack.c.l.b16 %v919
    %v984 = vunpack.c.l.b16 %v920
    %v985 = vunpack.c.l.b16 %v921
    %v986 = vunpack.c.l.b16 %v922
    %v987 = vunpack.c.l.b16 %v923
    %v988 = vunpack.c.l.b16 %v924
    %v989 = vunpack.c.l.b16 %v925
    %v990 = vunpack.c.l.b16 %v926
    %v991 = vunpack.c.l.b16 %v927
    %v992 = vunpack.c.l.b16 %v928
    %v993 = vunpack.c.l.b16 %v929
    %v994 = vunpack.c.l.b16 %v930
    %v995 = vunpack.c.l.b16 %v931
    %v996 = vunpack.c.l.b16 %v932
    %v997 = vunpack.c.l.b16 %v933
    %v998 = vunpack.c.l.b16 %v934
    %v999 = vpack.c.b16 %v968, %v967
    %v1000 = vpack.c.b16 %v970, %v969
    %v1001 = vpack.c.b16 %v972, %v971
    %v1002 = vpack.c.b16 %v974, %v973
    %v1003 = vpack.c.b16 %v976, %v975
    %v1004 = vpack.c.b16 %v978, %v977
    %v1005 = vpack.c.b16 %v980, %v979
    %v1006 = vpack.c.b16 %v982, %v981
    %v1007 = vpack.c.b16 %v984, %v983
    %v1008 = vpack.c.b16 %v986, %v985
    %v1009 = vpack.c.b16 %v988, %v987
    %v1010 = vpack.c.b16 %v990, %v989
    %v1011 = vpack.c.b16 %v992, %v991
    %v1012 = vpack.c.b16 %v994, %v993
    %v1013 = vpack.c.b16 %v996, %v995
    %v1014 = vpack.c.b16 %v998, %v997
    %v1031 = vlaneseq
    %v1032 = vshrl.u32 %v1031, 7
    %v1033 = vsub.s32 2, %v1032
    %v1034 = vrot.slane %v75, %v1033
    %1036 = vmatprep.subr.bf16.mxu0 0
    %1037 = vmatpush1.bf16.msra.mxu0 %v999
    %1038 = vmatprep.subr.bf16.mxu0 0
    %1039 = vmatpush1.bf16.msra.mxu0 %v1000
    %1040 = vmatprep.subr.bf16.mxu0 0
    %1041 = vmatpush1.bf16.msra.mxu0 %v1001
    %1042 = vmatprep.subr.bf16.mxu0 0
    %1043 = vmatpush1.bf16.msra.mxu0 %v1002
    %1044 = vmatprep.subr.bf16.mxu0 0
    %1045 = vmatpush1.bf16.msra.mxu0 %v1003
    %1046 = vmatprep.subr.bf16.mxu0 0
    %1047 = vmatpush1.bf16.msra.mxu0 %v1004
    %1048 = vmatprep.subr.bf16.mxu0 0
    %1049 = vmatpush1.bf16.msra.mxu0 %v1005
    %1050 = vmatprep.subr.bf16.mxu0 0
    %1051 = vmatpush1.bf16.msra.mxu0 %v1006
    %1052 = vmatprep.subr.bf16.mxu0 0
    %1053 = vmatpush1.bf16.msra.mxu0 %v1007
    %1054 = vmatprep.subr.bf16.mxu0 0
    %1055 = vmatpush1.bf16.msra.mxu0 %v1008
    %1056 = vmatprep.subr.bf16.mxu0 0
    %1057 = vmatpush1.bf16.msra.mxu0 %v1009
    %1058 = vmatprep.subr.bf16.mxu0 0
    %1059 = vmatpush1.bf16.msra.mxu0 %v1010
    %1060 = vmatprep.subr.bf16.mxu0 0
    %1061 = vmatpush1.bf16.msra.mxu0 %v1011
    %1062 = vmatprep.subr.bf16.mxu0 0
    %1063 = vmatpush1.bf16.msra.mxu0 %v1012
    %1064 = vmatprep.subr.bf16.mxu0 0
    %1065 = vmatpush1.bf16.msra.mxu0 %v1013
    %1066 = vmatprep.subr.bf16.mxu0 0
    %1067 = vmatpush1.bf16.msra.mxu0 %v1014
    %1068 = vmatprep.mubr.bf16.mxu0 %v902
    %1069 = vmatmul.mubr.bf16.gmra.mrb[0].mxu0 %v901
    %v1070 = vpop.f32.mrb[0].mxu0
    %v1071 = vadd.f32 %v1034, %v1070
    %v1072 = vpop.f32.mrb[0].mxu0
    %v1073 = vpop.f32.mrb[0].mxu0
    %v1074 = vpop.f32.mrb[0].mxu0
    %1075 = vdwg.mxu0
    %v1076 = vmax.f32 %v1071, 0.0
    %v1077 = vpack.c.bf16 %v1076, %v1076
    %v1078 = vld [vmem:[#allocation8] sm:$0xf]
    %v1079 = vld [vmem:[#allocation8 + $0x4] sm:$0xf]
    %v1080 = vld [vmem:[#allocation8 + $0x8] sm:$0xf]
    %v1081 = vld [vmem:[#allocation8 + $0xc] sm:$0xf]
    %v1082 = vld [vmem:[#allocation8 + $0x10] sm:$0xf]
    %v1083 = vld [vmem:[#allocation8 + $0x14] sm:$0xf]
    %v1084 = vld [vmem:[#allocation8 + $0x18] sm:$0xf]
    %v1085 = vld [vmem:[#allocation8 + $0x1c] sm:$0xf]
    %v1086 = vld [vmem:[#allocation8 + $0x20] sm:$0xf]
    %v1087 = vld [vmem:[#allocation8 + $0x24] sm:$0xf]
    %v1088 = vld [vmem:[#allocation8 + $0x28] sm:$0xf]
    %v1089 = vld [vmem:[#allocation8 + $0x2c] sm:$0xf]
    %v1090 = vld [vmem:[#allocation8 + $0x30] sm:$0xf]
    %v1091 = vld [vmem:[#allocation8 + $0x34] sm:$0xf]
    %v1092 = vld [vmem:[#allocation8 + $0x38] sm:$0xf]
    %v1093 = vld [vmem:[#allocation8 + $0x3c] sm:$0xf]
    %v1110 = vunpack.c.l.b16 %v1078
    %v1111 = vunpack.c.l.b16 %v1079
    %v1112 = vunpack.c.l.b16 %v1080
    %v1113 = vunpack.c.l.b16 %v1081
    %v1114 = vunpack.c.l.b16 %v1082
    %v1115 = vunpack.c.l.b16 %v1083
    %v1116 = vunpack.c.l.b16 %v1084
    %v1117 = vunpack.c.l.b16 %v1085
    %v1118 = vunpack.c.l.b16 %v1086
    %v1119 = vunpack.c.l.b16 %v1087
    %v1120 = vunpack.c.l.b16 %v1088
    %v1121 = vunpack.c.l.b16 %v1089
    %v1122 = vunpack.c.l.b16 %v1090
    %v1123 = vunpack.c.l.b16 %v1091
    %v1124 = vunpack.c.l.b16 %v1092
    %v1125 = vunpack.c.l.b16 %v1093
    %v1126 = vpack.c.b16 %v1111, %v1110
    %v1127 = vpack.c.b16 %v1113, %v1112
    %v1128 = vpack.c.b16 %v1115, %v1114
    %v1129 = vpack.c.b16 %v1117, %v1116
    %v1130 = vpack.c.b16 %v1119, %v1118
    %v1131 = vpack.c.b16 %v1121, %v1120
    %v1132 = vpack.c.b16 %v1123, %v1122
    %v1133 = vpack.c.b16 %v1125, %v1124
    %v1142 = vlaneseq
    %v1143 = vshrl.u32 %v1142, 7
    %v1144 = vsub.s32 3, %v1143
    %v1145 = vrot.slane %v75, %v1144
    %1147 = vmatprep.subr.bf16.mxu0 0
    %1148 = vmatpush1.bf16.msra.mxu0 %v1126
    %1149 = vmatprep.subr.bf16.mxu0 0
    %1150 = vmatpush1.bf16.msra.mxu0 %v1127
    %1151 = vmatprep.subr.bf16.mxu0 0
    %1152 = vmatpush1.bf16.msra.mxu0 %v1128
    %1153 = vmatprep.subr.bf16.mxu0 0
    %1154 = vmatpush1.bf16.msra.mxu0 %v1129
    %1155 = vmatprep.subr.bf16.mxu0 0
    %1156 = vmatpush1.bf16.msra.mxu0 %v1130
    %1157 = vmatprep.subr.bf16.mxu0 0
    %1158 = vmatpush1.bf16.msra.mxu0 %v1131
    %1159 = vmatprep.subr.bf16.mxu0 0
    %1160 = vmatpush1.bf16.msra.mxu0 %v1132
    %1161 = vmatprep.subr.bf16.mxu0 0
    %1162 = vmatpush1.bf16.msra.mxu0 %v1133
    %1163 = vmatprep.subr.bf16.mxu0 0
    %1164 = vmatpush1.bf16.msra.mxu0 0
    %1165 = vmatprep.subr.bf16.mxu0 0
    %1166 = vmatpush1.bf16.msra.mxu0 0
    %1167 = vmatprep.subr.bf16.mxu0 0
    %1168 = vmatpush1.bf16.msra.mxu0 0
    %1169 = vmatprep.subr.bf16.mxu0 0
    %1170 = vmatpush1.bf16.msra.mxu0 0
    %1171 = vmatprep.subr.bf16.mxu0 0
    %1172 = vmatpush1.bf16.msra.mxu0 0
    %1173 = vmatprep.subr.bf16.mxu0 0
    %1174 = vmatpush1.bf16.msra.mxu0 0
    %1175 = vmatprep.subr.bf16.mxu0 0
    %1176 = vmatpush1.bf16.msra.mxu0 0
    %1177 = vmatprep.subr.bf16.mxu0 0
    %1178 = vmatpush1.bf16.msra.mxu0 0
    %1179 = vmatprep.mubr.bf16.mxu0 0
    %1180 = vmatmul.mubr.bf16.gmra.mrb[0].mxu0 %v1077
    %v1181 = vpop.f32.mrb[0].mxu0
    %v1182 = vadd.f32 %v1145, %v1181
    %v1183 = vpop.f32.mrb[0].mxu0
    %v1184 = vpop.f32.mrb[0].mxu0
    %v1185 = vpop.f32.mrb[0].mxu0
    %1186 = vdwg.mxu0
    %1187 = vst [vmem:[#allocation10] sm:$0x1] %v1182
    // Predicated region
    $region38: #{tpu_custom_call.1} parent=1 // pred_check
      _
    $region39: #{tpu_custom_call.1} parent=1 // pred_check_branch
      %1189 = sbr.rel (0) target = $region41
    $region40: #{tpu_custom_call.1} parent=1 // pred_region
      %s1191 = ssub.s32 16, 16
      %1192 = vsyncadd [#allocation4], %s1191
      %s1194 = sshll.u32 [#allocation10], 4
      %s1195 = int_to_ptr.vmem [resolvable:$true] %s1194
      %1197 = dma.vmem_to_hbm [thread:$0]  %s1195, 16, %s5, [#allocation4]
    $region41: #{tpu_custom_call.1} parent=1 // pred_fallthru
      _
    // Predicated region
    $region42: #{tpu_custom_call.1} parent=1 // pred_check
      _
    $region43: #{tpu_custom_call.1} parent=1 // pred_check_branch
      %1199 = sbr.rel (0) target = $region45
    $region44: #{tpu_custom_call.1} parent=1 // pred_region
      %1200 = dma.done [#allocation4], 16
    $region45: #{tpu_custom_call.1} parent=1 // pred_fallthru
      _
    %1201 = vsyncpa [#allocation3], 1
    %1202 = vsyncpa [#allocation6], 1
    %1203 = vsyncpa [#allocation9], 1
    %1204 = vsyncpa [#allocation4], 1

</llo_original>
